<compile_context>
chip_gen: v5e
topology: v5e:2x2
jax: 0.10.0
libtpu: 0.0.40
codegen_flags: <defaults>
</compile_context>

<pallas_src>
import math

import jax
import jax.numpy as jnp
from jax.experimental import pallas as pl
from jax.experimental.pallas import tpu as pltpu


def _sigmoid_1eup(x):
    # sigmoid(x) == 0.5 * (tanh(0.5 * x) + 1): a single EUP transcendental per vreg
    # (jax.nn.sigmoid lowers to exp + full-precision divide).
    return 0.5 * (jnp.tanh(0.5 * x) + 1.0)


def _mlp_kernel_t(xt_ref, w1t_ref, b1t_ref, w2t_ref, b2t_ref, w3t_ref, b3t_ref, ot_ref):
    xt = xt_ref[...]                       # (2, TB)   f32, batch on lanes
    w1t = w1t_ref[...]                     # (128, 2)  f32

    # Layer 1: Linear(2, 128) + Sigmoid.
    # K=2 contraction would waste the MXU; do it as two VPU broadcast-FMAs.
    # xt[0:1,:] / xt[1:2,:] are stride-0 sublane broadcasts; w1t[:, k:k+1] is a tiny
    # (128,1) lane broadcast.
    h1 = (w1t[:, 0:1] * xt[0:1, :] +
          w1t[:, 1:2] * xt[1:2, :] +
          b1t_ref[...])                    # (128, TB)
    h1 = _sigmoid_1eup(h1)

    # Layer 2: Linear(128, 64) + Sigmoid — the only matmul that really uses the MXU.
    # bf16 operands (MXU-native on v5e/v6e/v7x), f32 accumulation, lane-dense N=TB.
    h2 = jnp.dot(w2t_ref[...].astype(jnp.bfloat16),
                 h1.astype(jnp.bfloat16),
                 preferred_element_type=jnp.float32) + b2t_ref[...]   # (64, TB)
    h2 = _sigmoid_1eup(h2)

    # Layer 3: Linear(64, 4) + Softmax over the 4 class sublanes (per batch column).
    logits = jnp.dot(w3t_ref[...], h2,
                     preferred_element_type=jnp.float32) + b3t_ref[...]   # (4, TB)
    m = jnp.max(logits, axis=0, keepdims=True)
    e = jnp.exp(logits - m)
    denom = jnp.sum(e, axis=0, keepdims=True)
    # Exact normalization (full-precision reciprocal): rows sum to 1 to f32 precision.
    ot_ref[...] = (e * (1.0 / denom)).astype(ot_ref.dtype)


def first_network_sequential(x, params, *, tb=4096):
    """x: (B, 2) float32 -> (B, 4) float32 softmax probabilities."""
    w1, b1, w2, b2, w3, b3 = params        # (in, out) / (1, out) layout
    B = x.shape[0]

    # Batch tile along the lane axis.  VMEM cost is ~1 KB per batch column (f32 + bf16
    # copies of the (128,TB)/(64,TB) intermediates, plus padded x/out buffers), so
    # tb=4096 -> ~4-5 MiB per step, comfortably under v5e's 16 MiB scoped VMEM.
    tb = max(128, (tb // 128) * 128)
    if B <= 256:
        TB = B                             # one tile; block == full array dims
    elif B <= tb:
        # ~B/2 rounded up to a multiple of 128 -> >=2 grid steps so both v7x TCs get work.
        TB = ((B + 255) // 256) * 128
    else:
        TB = tb
    grid = (pl.cdiv(B, TB),)

    # Transposed (batch-on-lanes) layouts for the kernel; transposes are cheap XLA ops.
    xt = x.T                               # (2, B)
    w1t, b1t = w1.T, b1.T                  # (128, 2), (128, 1)
    w2t, b2t = w2.T, b2.T                  # (64, 128), (64, 1)
    w3t, b3t = w3.T, b3.T                  # (4, 64),  (4, 1)

    x_spec = pl.BlockSpec((2, TB), lambda i: (0, i))
    o_spec = pl.BlockSpec((4, TB), lambda i: (0, i))
    # Weights/biases: constant index_map -> fetched once, VMEM-resident across steps.
    const = lambda a: pl.BlockSpec(a.shape, lambda i: (0, 0))

    out_t = pl.pallas_call(
        _mlp_kernel_t,
        out_shape=jax.ShapeDtypeStruct((4, B), jnp.float32),
        grid_spec=pltpu.PrefetchScalarGridSpec(
            num_scalar_prefetch=0,
            grid=grid,
            in_specs=[
                x_spec,
                const(w1t), const(b1t),
                const(w2t), const(b2t),
                const(w3t), const(b3t),
            ],
            out_specs=o_spec,
        ),
        compiler_params=pltpu.CompilerParams(
            # Batch tiles are independent -> allow the grid axis to split across TCs.
            dimension_semantics=("parallel",),
        ),
    )(xt, w1t, b1t, w2t, b2t, w3t, b3t)

    return out_t.T                         # (B, 4)


def init_params(key):
    """Deterministic init mimicking PyTorch nn.Linear defaults:
    U(-1/sqrt(fan_in), +1/sqrt(fan_in)) for both weight and bias."""
    dims = [(2, 128), (128, 64), (64, 4)]
    params = []
    for (fan_in, fan_out) in dims:
        key, kw, kb = jax.random.split(key, 3)
        bound = 1.0 / math.sqrt(fan_in)
        # stored as (in, out) so the reference computes x @ W
        w = jax.random.uniform(kw, (fan_in, fan_out), jnp.float32, -bound, bound)
        b = jax.random.uniform(kb, (1, fan_out), jnp.float32, -bound, bound)
        params.extend([w, b])
    return tuple(params)


def _reference(x, params):
    w1, b1, w2, b2, w3, b3 = params
    h1 = jax.nn.sigmoid(x @ w1 + b1)
    h2 = jax.nn.sigmoid(h1 @ w2 + b2)
    return jax.nn.softmax(h2 @ w3 + b3, axis=-1)


if __name__ == "__main__":
    key = jax.random.PRNGKey(0)
    kx, kx2, kp = jax.random.split(key, 3)
    params = init_params(kp)

    # Small batch: single-tile path (grid of 1).
    B = 8
    x = jax.random.normal(kx, (B, 2), dtype=jnp.float32)
    out = jax.block_until_ready(first_network_sequential(x, params))
    ref = _reference(x, params)
    assert out.shape == (B, 4)
    # bf16 layer-2 matmul -> compare against the pure-f32 reference with a ~5e-3 budget.
    assert jnp.allclose(out, ref, atol=5e-3, rtol=5e-3)
    # Exact softmax normalization -> rows sum to 1 to f32 precision.
    assert jnp.allclose(jnp.sum(out, axis=-1), jnp.ones((B,), jnp.float32), atol=1e-5)

    # Larger batch: exercises the lane-tiled grid (2 tiles of 256) with resident weights.
    B2 = 512
    x2 = jax.random.normal(kx2, (B2, 2), dtype=jnp.float32)
    out2 = jax.block_until_ready(first_network_sequential(x2, params))
    ref2 = _reference(x2, params)
    assert out2.shape == (B2, 4)
    assert jnp.allclose(out2, ref2, atol=5e-3, rtol=5e-3)
    assert jnp.allclose(jnp.sum(out2, axis=-1), jnp.ones((B2,), jnp.float32), atol=1e-5)

    print("KERNEL_OK")
</pallas_src>

<mosaic_0001>
module attributes {stable_mosaic.version = 11 : i64} {
  func.func @_mlp_kernel_t(%arg0: i32, %arg1: memref<2x8xf32, #tpu.memory_space<vmem>>, %arg2: memref<128x2xf32, #tpu.memory_space<vmem>>, %arg3: memref<128x1xf32, #tpu.memory_space<vmem>>, %arg4: memref<64x128xf32, #tpu.memory_space<vmem>>, %arg5: memref<64x1xf32, #tpu.memory_space<vmem>>, %arg6: memref<4x64xf32, #tpu.memory_space<vmem>>, %arg7: memref<4x1xf32, #tpu.memory_space<vmem>>, %arg8: memref<4x8xf32, #tpu.memory_space<vmem>>) attributes {dimension_semantics = [#tpu.dimension_semantics<parallel>], iteration_bounds = array<i64: 1>, scalar_prefetch = 0 : i64, scratch_operands = 0 : i64, tpu.core_type = #tpu.core_type<tc>, window_params = [{transform_indices = @transform_0, window_bounds = array<i64: 2, 8>}, {pipeline_mode = #tpu.pipeline_mode<synchronous>, transform_indices = @transform_1, window_bounds = array<i64: 128, 2>}, {pipeline_mode = #tpu.pipeline_mode<synchronous>, transform_indices = @transform_2, window_bounds = array<i64: 128, 1>}, {pipeline_mode = #tpu.pipeline_mode<synchronous>, transform_indices = @transform_3, window_bounds = array<i64: 64, 128>}, {pipeline_mode = #tpu.pipeline_mode<synchronous>, transform_indices = @transform_4, window_bounds = array<i64: 64, 1>}, {pipeline_mode = #tpu.pipeline_mode<synchronous>, transform_indices = @transform_5, window_bounds = array<i64: 4, 64>}, {pipeline_mode = #tpu.pipeline_mode<synchronous>, transform_indices = @transform_6, window_bounds = array<i64: 4, 1>}, {transform_indices = @transform_7, window_bounds = array<i64: 4, 8>}]} {
    %c0 = arith.constant 0 : index
    %c0_0 = arith.constant 0 : index
    %0 = vector.load %arg1[%c0, %c0_0] : memref<2x8xf32, #tpu.memory_space<vmem>>, vector<2x8xf32>
    %c0_1 = arith.constant 0 : index
    %c0_2 = arith.constant 0 : index
    %1 = vector.load %arg2[%c0_1, %c0_2] : memref<128x2xf32, #tpu.memory_space<vmem>>, vector<128x2xf32>
    %2 = vector.extract_strided_slice %1 {offsets = [0, 0], sizes = [128, 1], strides = [1, 1]} : vector<128x2xf32> to vector<128x1xf32>
    %3 = vector.extract_strided_slice %0 {offsets = [0, 0], sizes = [1, 8], strides = [1, 1]} : vector<2x8xf32> to vector<1x8xf32>
    %4 = vector.broadcast %2 : vector<128x1xf32> to vector<128x8xf32>
    %5 = vector.broadcast %3 : vector<1x8xf32> to vector<128x8xf32>
    %6 = arith.mulf %4, %5 : vector<128x8xf32>
    %7 = vector.extract_strided_slice %1 {offsets = [0, 1], sizes = [128, 1], strides = [1, 1]} : vector<128x2xf32> to vector<128x1xf32>
    %8 = vector.extract_strided_slice %0 {offsets = [1, 0], sizes = [1, 8], strides = [1, 1]} : vector<2x8xf32> to vector<1x8xf32>
    %9 = vector.broadcast %7 : vector<128x1xf32> to vector<128x8xf32>
    %10 = vector.broadcast %8 : vector<1x8xf32> to vector<128x8xf32>
    %11 = arith.mulf %9, %10 : vector<128x8xf32>
    %12 = arith.addf %6, %11 : vector<128x8xf32>
    %c0_3 = arith.constant 0 : index
    %c0_4 = arith.constant 0 : index
    %13 = vector.load %arg3[%c0_3, %c0_4] : memref<128x1xf32, #tpu.memory_space<vmem>>, vector<128x1xf32>
    %14 = vector.broadcast %13 : vector<128x1xf32> to vector<128x8xf32>
    %15 = arith.addf %12, %14 : vector<128x8xf32>
    %cst = arith.constant 5.000000e-01 : f32
    %16 = vector.broadcast %cst : f32 to vector<128x8xf32>
    %17 = arith.mulf %16, %15 : vector<128x8xf32>
    %18 = math.tanh %17 : vector<128x8xf32>
    %cst_5 = arith.constant 1.000000e+00 : f32
    %19 = vector.broadcast %cst_5 : f32 to vector<128x8xf32>
    %20 = arith.addf %18, %19 : vector<128x8xf32>
    %cst_6 = arith.constant 5.000000e-01 : f32
    %21 = vector.broadcast %cst_6 : f32 to vector<128x8xf32>
    %22 = arith.mulf %21, %20 : vector<128x8xf32>
    %c0_7 = arith.constant 0 : index
    %c0_8 = arith.constant 0 : index
    %23 = vector.load %arg4[%c0_7, %c0_8] : memref<64x128xf32, #tpu.memory_space<vmem>>, vector<64x128xf32>
    %24 = arith.truncf %23 : vector<64x128xf32> to vector<64x128xbf16>
    %25 = arith.truncf %22 : vector<128x8xf32> to vector<128x8xbf16>
    %cst_9 = arith.constant dense<0.000000e+00> : vector<64x8xf32>
    %26 = tpu.matmul %24, %25, %cst_9 {dimension_numbers = #tpu.dot_dimension_numbers<[1], [0], [0], [1], [0, 0, 1, 1], [], []>} : vector<64x128xbf16>, vector<128x8xbf16>, vector<64x8xf32> -> vector<64x8xf32>
    %c0_10 = arith.constant 0 : index
    %c0_11 = arith.constant 0 : index
    %27 = vector.load %arg5[%c0_10, %c0_11] : memref<64x1xf32, #tpu.memory_space<vmem>>, vector<64x1xf32>
    %28 = vector.broadcast %27 : vector<64x1xf32> to vector<64x8xf32>
    %29 = arith.addf %26, %28 : vector<64x8xf32>
    %cst_12 = arith.constant 5.000000e-01 : f32
    %30 = vector.broadcast %cst_12 : f32 to vector<64x8xf32>
    %31 = arith.mulf %30, %29 : vector<64x8xf32>
    %32 = math.tanh %31 : vector<64x8xf32>
    %cst_13 = arith.constant 1.000000e+00 : f32
    %33 = vector.broadcast %cst_13 : f32 to vector<64x8xf32>
    %34 = arith.addf %32, %33 : vector<64x8xf32>
    %cst_14 = arith.constant 5.000000e-01 : f32
    %35 = vector.broadcast %cst_14 : f32 to vector<64x8xf32>
    %36 = arith.mulf %35, %34 : vector<64x8xf32>
    %c0_15 = arith.constant 0 : index
    %c0_16 = arith.constant 0 : index
    %37 = vector.load %arg6[%c0_15, %c0_16] : memref<4x64xf32, #tpu.memory_space<vmem>>, vector<4x64xf32>
    %cst_17 = arith.constant dense<0.000000e+00> : vector<4x8xf32>
    %38 = tpu.matmul %37, %36, %cst_17 {dimension_numbers = #tpu.dot_dimension_numbers<[1], [0], [0], [1], [0, 0, 1, 1], [], []>} : vector<4x64xf32>, vector<64x8xf32>, vector<4x8xf32> -> vector<4x8xf32>
    %c0_18 = arith.constant 0 : index
    %c0_19 = arith.constant 0 : index
    %39 = vector.load %arg7[%c0_18, %c0_19] : memref<4x1xf32, #tpu.memory_space<vmem>>, vector<4x1xf32>
    %40 = vector.broadcast %39 : vector<4x1xf32> to vector<4x8xf32>
    %41 = arith.addf %38, %40 : vector<4x8xf32>
    %cst_20 = arith.constant dense<0xFF800000> : vector<8xf32>
    %42 = vector.multi_reduction <maximumf>, %41, %cst_20 [0] : vector<4x8xf32> to vector<8xf32>
    %43 = vector.shape_cast %42 : vector<8xf32> to vector<1x8xf32>
    %44 = vector.broadcast %43 : vector<1x8xf32> to vector<4x8xf32>
    %45 = arith.subf %41, %44 : vector<4x8xf32>
    %46 = math.exp %45 : vector<4x8xf32>
    %cst_21 = arith.constant dense<0.000000e+00> : vector<8xf32>
    %47 = vector.multi_reduction <add>, %46, %cst_21 [0] : vector<4x8xf32> to vector<8xf32>
    %48 = vector.shape_cast %47 : vector<8xf32> to vector<1x8xf32>
    %cst_22 = arith.constant 1.000000e+00 : f32
    %49 = vector.broadcast %cst_22 : f32 to vector<1x8xf32>
    %50 = arith.divf %49, %48 : vector<1x8xf32>
    %51 = vector.broadcast %50 : vector<1x8xf32> to vector<4x8xf32>
    %52 = arith.mulf %46, %51 : vector<4x8xf32>
    %c0_23 = arith.constant 0 : index
    %c0_24 = arith.constant 0 : index
    %53 = vector.load %arg8[%c0_23, %c0_24] : memref<4x8xf32, #tpu.memory_space<vmem>>, vector<4x8xf32>
    tpu.vector_store %arg8[%c0_23, %c0_24], %52 {strides = array<i32>} : memref<4x8xf32, #tpu.memory_space<vmem>>, vector<4x8xf32>,
    return
  }
  func.func @transform_0(%arg0: i32) -> (i32, i32) {
    %c0_i32 = arith.constant 0 : i32
    %c0_i32_0 = arith.constant 0 : i32
    return %c0_i32, %arg0 : i32, i32
  }
  func.func @transform_1(%arg0: i32) -> (i32, i32) {
    %c0_i32 = arith.constant 0 : i32
    %c0_i32_0 = arith.constant 0 : i32
    %c0_i32_1 = arith.constant 0 : i32
    return %c0_i32, %c0_i32_0 : i32, i32
  }
  func.func @transform_2(%arg0: i32) -> (i32, i32) {
    %c0_i32 = arith.constant 0 : i32
    %c0_i32_0 = arith.constant 0 : i32
    %c0_i32_1 = arith.constant 0 : i32
    return %c0_i32, %c0_i32_0 : i32, i32
  }
  func.func @transform_3(%arg0: i32) -> (i32, i32) {
    %c0_i32 = arith.constant 0 : i32
    %c0_i32_0 = arith.constant 0 : i32
    %c0_i32_1 = arith.constant 0 : i32
    return %c0_i32, %c0_i32_0 : i32, i32
  }
  func.func @transform_4(%arg0: i32) -> (i32, i32) {
    %c0_i32 = arith.constant 0 : i32
    %c0_i32_0 = arith.constant 0 : i32
    %c0_i32_1 = arith.constant 0 : i32
    return %c0_i32, %c0_i32_0 : i32, i32
  }
  func.func @transform_5(%arg0: i32) -> (i32, i32) {
    %c0_i32 = arith.constant 0 : i32
    %c0_i32_0 = arith.constant 0 : i32
    %c0_i32_1 = arith.constant 0 : i32
    return %c0_i32, %c0_i32_0 : i32, i32
  }
  func.func @transform_6(%arg0: i32) -> (i32, i32) {
    %c0_i32 = arith.constant 0 : i32
    %c0_i32_0 = arith.constant 0 : i32
    %c0_i32_1 = arith.constant 0 : i32
    return %c0_i32, %c0_i32_0 : i32, i32
  }
  func.func @transform_7(%arg0: i32) -> (i32, i32) {
    %c0_i32 = arith.constant 0 : i32
    %c0_i32_0 = arith.constant 0 : i32
    return %c0_i32, %arg0 : i32, i32
  }
}

</mosaic_0001>

<llo_original>
// kernel: tpu_custom_call.1
$region0: #{tpu_custom_call.1}
  #allocation0 [shape = 'u32[]', space=smem, size = 0x4, offset = 0x4, fixed_abs, tag = 'smem constant byte address 0x4 - core index']
  #allocation1 [shape = 'u32[72,128]{1,0:T(1,128)}', space=vmem, size = 0x9000, scoped, tag = 'internal scratch']
  %s0 = inlined_call_operand.vmem [shape: f32[2,8], index: 0, kind: input, shape index: {}]
  %s1 = inlined_call_operand.vmem [shape: f32[128,2], index: 1, kind: input, shape index: {}]
  %s2 = inlined_call_operand.vmem [shape: f32[128,1], index: 2, kind: input, shape index: {}]
  %s3 = inlined_call_operand.vmem [shape: f32[64,128], index: 3, kind: input, shape index: {}]
  %s4 = inlined_call_operand.vmem [shape: f32[64,1], index: 4, kind: input, shape index: {}]
  %s5 = inlined_call_operand.vmem [shape: f32[4,64], index: 5, kind: input, shape index: {}]
  %s6 = inlined_call_operand.vmem [shape: f32[4,1], index: 6, kind: input, shape index: {}]
  %s7 = inlined_call_operand.hbm [shape: f32[4,8], index: 7, kind: output, shape index: {}]
  %s8 = sld [smem:[#allocation0]]
  $region38: #{tpu_custom_call.1} parent=0
    _
  %s10 = ssub.s32 1, %s8
  %s11 = scalar_select 0, %s10, %s8
  $region1: #{tpu_custom_call.1} parent=0
    #allocation2 [shape = 'u8[2048]{0}', space=vmem, size = 0x800, scoped, tag = 'output window, operand 0, single buffered']
    #allocation3 [shape = 's32[1]{0}', space=sflag, size = 0x4, scoped, tag = 'scoped memory for tpu_custom_call.1']
    %12 = vsyncpa [#allocation3], 0
    // Predicated region
    $region2: #{tpu_custom_call.1} parent=1 // pred_check
      _
    $region3: #{tpu_custom_call.1} parent=1 // pred_check_branch
      %14 = sbr.rel (0) target = $region5
    $region4: #{tpu_custom_call.1} parent=1 // pred_region
      _
    $region5: #{tpu_custom_call.1} parent=1 // pred_fallthru
      _
    // Predicated region
    $region6: #{tpu_custom_call.1} parent=1 // pred_check
      _
    $region7: #{tpu_custom_call.1} parent=1 // pred_check_branch
      %16 = sbr.rel (0) target = $region9
    $region8: #{tpu_custom_call.1} parent=1 // pred_region
      _
    $region9: #{tpu_custom_call.1} parent=1 // pred_fallthru
      _
    // Predicated region
    $region10: #{tpu_custom_call.1} parent=1 // pred_check
      _
    $region11: #{tpu_custom_call.1} parent=1 // pred_check_branch
      %18 = sbr.rel (0) target = $region13
    $region12: #{tpu_custom_call.1} parent=1 // pred_region
      _
    $region13: #{tpu_custom_call.1} parent=1 // pred_fallthru
      _
    // Predicated region
    $region14: #{tpu_custom_call.1} parent=1 // pred_check
      _
    $region15: #{tpu_custom_call.1} parent=1 // pred_check_branch
      %20 = sbr.rel (0) target = $region17
    $region16: #{tpu_custom_call.1} parent=1 // pred_region
      _
    $region17: #{tpu_custom_call.1} parent=1 // pred_fallthru
      _
    // Predicated region
    $region18: #{tpu_custom_call.1} parent=1 // pred_check
      _
    $region19: #{tpu_custom_call.1} parent=1 // pred_check_branch
      %22 = sbr.rel (0) target = $region21
    $region20: #{tpu_custom_call.1} parent=1 // pred_region
      _
    $region21: #{tpu_custom_call.1} parent=1 // pred_fallthru
      _
    // Predicated region
    $region22: #{tpu_custom_call.1} parent=1 // pred_check
      _
    $region23: #{tpu_custom_call.1} parent=1 // pred_check_branch
      %24 = sbr.rel (0) target = $region25
    $region24: #{tpu_custom_call.1} parent=1 // pred_region
      _
    $region25: #{tpu_custom_call.1} parent=1 // pred_fallthru
      _
    // Predicated region
    $region26: #{tpu_custom_call.1} parent=1 // pred_check
      _
    $region27: #{tpu_custom_call.1} parent=1 // pred_check_branch
      %26 = sbr.rel (0) target = $region29
    $region28: #{tpu_custom_call.1} parent=1 // pred_region
      _
    $region29: #{tpu_custom_call.1} parent=1 // pred_fallthru
      _
    %v27 = vld [vmem:[%s0] sm:$0x3]
    %v28 = vld [vmem:[%s1] sm:$0xff]
    %v29 = vld [vmem:[%s1 + $0x8] sm:$0xff]
    %v30 = vld [vmem:[%s1 + $0x10] sm:$0xff]
    %v31 = vld [vmem:[%s1 + $0x18] sm:$0xff]
    %v32 = vld [vmem:[%s1 + $0x20] sm:$0xff]
    %v33 = vld [vmem:[%s1 + $0x28] sm:$0xff]
    %v34 = vld [vmem:[%s1 + $0x30] sm:$0xff]
    %v35 = vld [vmem:[%s1 + $0x38] sm:$0xff]
    %v36 = vld [vmem:[%s1 + $0x40] sm:$0xff]
    %v37 = vld [vmem:[%s1 + $0x48] sm:$0xff]
    %v38 = vld [vmem:[%s1 + $0x50] sm:$0xff]
    %v39 = vld [vmem:[%s1 + $0x58] sm:$0xff]
    %v40 = vld [vmem:[%s1 + $0x60] sm:$0xff]
    %v41 = vld [vmem:[%s1 + $0x68] sm:$0xff]
    %v42 = vld [vmem:[%s1 + $0x70] sm:$0xff]
    %v43 = vld [vmem:[%s1 + $0x78] sm:$0xff]
    %45 = vset.pattern.permute.xlu0 0
    %46 = vperm.xlu0 %45, %v28
    %v47 = vpop.permute.xlu0 %46
    %50 = vset.pattern.permute.xlu0 0
    %51 = vperm.xlu0 %50, %v29
    %v52 = vpop.permute.xlu0 %51
    %55 = vset.pattern.permute.xlu0 0
    %56 = vperm.xlu0 %55, %v30
    %v57 = vpop.permute.xlu0 %56
    %60 = vset.pattern.permute.xlu0 0
    %61 = vperm.xlu0 %60, %v31
    %v62 = vpop.permute.xlu0 %61
    %65 = vset.pattern.permute.xlu0 0
    %66 = vperm.xlu0 %65, %v32
    %v67 = vpop.permute.xlu0 %66
    %70 = vset.pattern.permute.xlu0 0
    %71 = vperm.xlu0 %70, %v33
    %v72 = vpop.permute.xlu0 %71
    %75 = vset.pattern.permute.xlu0 0
    %76 = vperm.xlu0 %75, %v34
    %v77 = vpop.permute.xlu0 %76
    %80 = vset.pattern.permute.xlu0 0
    %81 = vperm.xlu0 %80, %v35
    %v82 = vpop.permute.xlu0 %81
    %85 = vset.pattern.permute.xlu0 0
    %86 = vperm.xlu0 %85, %v36
    %v87 = vpop.permute.xlu0 %86
    %90 = vset.pattern.permute.xlu0 0
    %91 = vperm.xlu0 %90, %v37
    %v92 = vpop.permute.xlu0 %91
    %95 = vset.pattern.permute.xlu0 0
    %96 = vperm.xlu0 %95, %v38
    %v97 = vpop.permute.xlu0 %96
    %100 = vset.pattern.permute.xlu0 0
    %101 = vperm.xlu0 %100, %v39
    %v102 = vpop.permute.xlu0 %101
    %105 = vset.pattern.permute.xlu0 0
    %106 = vperm.xlu0 %105, %v40
    %v107 = vpop.permute.xlu0 %106
    %110 = vset.pattern.permute.xlu0 0
    %111 = vperm.xlu0 %110, %v41
    %v112 = vpop.permute.xlu0 %111
    %115 = vset.pattern.permute.xlu0 0
    %116 = vperm.xlu0 %115, %v42
    %v117 = vpop.permute.xlu0 %116
    %120 = vset.pattern.permute.xlu0 0
    %121 = vperm.xlu0 %120, %v43
    %v122 = vpop.permute.xlu0 %121
    %v124 = vperm.slane %v27, 0
    %v125 = vmul.f32 %v47, %v124
    %v126 = vmul.f32 %v52, %v124
    %v127 = vmul.f32 %v57, %v124
    %v128 = vmul.f32 %v62, %v124
    %v129 = vmul.f32 %v67, %v124
    %v130 = vmul.f32 %v72, %v124
    %v131 = vmul.f32 %v77, %v124
    %v132 = vmul.f32 %v82, %v124
    %v133 = vmul.f32 %v87, %v124
    %v134 = vmul.f32 %v92, %v124
    %v135 = vmul.f32 %v97, %v124
    %v136 = vmul.f32 %v102, %v124
    %v137 = vmul.f32 %v107, %v124
    %v138 = vmul.f32 %v112, %v124
    %v139 = vmul.f32 %v117, %v124
    %v140 = vmul.f32 %v122, %v124
    %141 = vset.pattern.permute.xlu0 1
    %142 = vperm.xlu0 %141, %v28
    %v143 = vpop.permute.xlu0 %142
    %145 = vset.pattern.permute.xlu0 1
    %146 = vperm.xlu0 %145, %v29
    %v147 = vpop.permute.xlu0 %146
    %149 = vset.pattern.permute.xlu0 1
    %150 = vperm.xlu0 %149, %v30
    %v151 = vpop.permute.xlu0 %150
    %153 = vset.pattern.permute.xlu0 1
    %154 = vperm.xlu0 %153, %v31
    %v155 = vpop.permute.xlu0 %154
    %157 = vset.pattern.permute.xlu0 1
    %158 = vperm.xlu0 %157, %v32
    %v159 = vpop.permute.xlu0 %158
    %161 = vset.pattern.permute.xlu0 1
    %162 = vperm.xlu0 %161, %v33
    %v163 = vpop.permute.xlu0 %162
    %165 = vset.pattern.permute.xlu0 1
    %166 = vperm.xlu0 %165, %v34
    %v167 = vpop.permute.xlu0 %166
    %169 = vset.pattern.permute.xlu0 1
    %170 = vperm.xlu0 %169, %v35
    %v171 = vpop.permute.xlu0 %170
    %173 = vset.pattern.permute.xlu0 1
    %174 = vperm.xlu0 %173, %v36
    %v175 = vpop.permute.xlu0 %174
    %177 = vset.pattern.permute.xlu0 1
    %178 = vperm.xlu0 %177, %v37
    %v179 = vpop.permute.xlu0 %178
    %181 = vset.pattern.permute.xlu0 1
    %182 = vperm.xlu0 %181, %v38
    %v183 = vpop.permute.xlu0 %182
    %185 = vset.pattern.permute.xlu0 1
    %186 = vperm.xlu0 %185, %v39
    %v187 = vpop.permute.xlu0 %186
    %189 = vset.pattern.permute.xlu0 1
    %190 = vperm.xlu0 %189, %v40
    %v191 = vpop.permute.xlu0 %190
    %193 = vset.pattern.permute.xlu0 1
    %194 = vperm.xlu0 %193, %v41
    %v195 = vpop.permute.xlu0 %194
    %197 = vset.pattern.permute.xlu0 1
    %198 = vperm.xlu0 %197, %v42
    %v199 = vpop.permute.xlu0 %198
    %201 = vset.pattern.permute.xlu0 1
    %202 = vperm.xlu0 %201, %v43
    %v203 = vpop.permute.xlu0 %202
    %v205 = vperm.slane %v27, 1
    %v206 = vmul.f32 %v143, %v205
    %v207 = vmul.f32 %v147, %v205
    %v208 = vmul.f32 %v151, %v205
    %v209 = vmul.f32 %v155, %v205
    %v210 = vmul.f32 %v159, %v205
    %v211 = vmul.f32 %v163, %v205
    %v212 = vmul.f32 %v167, %v205
    %v213 = vmul.f32 %v171, %v205
    %v214 = vmul.f32 %v175, %v205
    %v215 = vmul.f32 %v179, %v205
    %v216 = vmul.f32 %v183, %v205
    %v217 = vmul.f32 %v187, %v205
    %v218 = vmul.f32 %v191, %v205
    %v219 = vmul.f32 %v195, %v205
    %v220 = vmul.f32 %v199, %v205
    %v221 = vmul.f32 %v203, %v205
    %v222 = vadd.f32 %v125, %v206
    %v223 = vadd.f32 %v126, %v207
    %v224 = vadd.f32 %v127, %v208
    %v225 = vadd.f32 %v128, %v209
    %v226 = vadd.f32 %v129, %v210
    %v227 = vadd.f32 %v130, %v211
    %v228 = vadd.f32 %v131, %v212
    %v229 = vadd.f32 %v132, %v213
    %v230 = vadd.f32 %v133, %v214
    %v231 = vadd.f32 %v134, %v215
    %v232 = vadd.f32 %v135, %v216
    %v233 = vadd.f32 %v136, %v217
    %v234 = vadd.f32 %v137, %v218
    %v235 = vadd.f32 %v138, %v219
    %v236 = vadd.f32 %v139, %v220
    %v237 = vadd.f32 %v140, %v221
    %v238 = vld [vmem:[%s2] sm:$0xff]
    %v239 = vld [vmem:[%s2 + $0x8] sm:$0xff]
    %v240 = vld [vmem:[%s2 + $0x10] sm:$0xff]
    %v241 = vld [vmem:[%s2 + $0x18] sm:$0xff]
    %v242 = vld [vmem:[%s2 + $0x20] sm:$0xff]
    %v243 = vld [vmem:[%s2 + $0x28] sm:$0xff]
    %v244 = vld [vmem:[%s2 + $0x30] sm:$0xff]
    %v245 = vld [vmem:[%s2 + $0x38] sm:$0xff]
    %v246 = vld [vmem:[%s2 + $0x40] sm:$0xff]
    %v247 = vld [vmem:[%s2 + $0x48] sm:$0xff]
    %v248 = vld [vmem:[%s2 + $0x50] sm:$0xff]
    %v249 = vld [vmem:[%s2 + $0x58] sm:$0xff]
    %v250 = vld [vmem:[%s2 + $0x60] sm:$0xff]
    %v251 = vld [vmem:[%s2 + $0x68] sm:$0xff]
    %v252 = vld [vmem:[%s2 + $0x70] sm:$0xff]
    %v253 = vld [vmem:[%s2 + $0x78] sm:$0xff]
    %255 = vset.pattern.permute.xlu0 0
    %256 = vperm.xlu0 %255, %v238
    %v257 = vpop.permute.xlu0 %256
    %260 = vset.pattern.permute.xlu0 0
    %261 = vperm.xlu0 %260, %v239
    %v262 = vpop.permute.xlu0 %261
    %265 = vset.pattern.permute.xlu0 0
    %266 = vperm.xlu0 %265, %v240
    %v267 = vpop.permute.xlu0 %266
    %270 = vset.pattern.permute.xlu0 0
    %271 = vperm.xlu0 %270, %v241
    %v272 = vpop.permute.xlu0 %271
    %275 = vset.pattern.permute.xlu0 0
    %276 = vperm.xlu0 %275, %v242
    %v277 = vpop.permute.xlu0 %276
    %280 = vset.pattern.permute.xlu0 0
    %281 = vperm.xlu0 %280, %v243
    %v282 = vpop.permute.xlu0 %281
    %285 = vset.pattern.permute.xlu0 0
    %286 = vperm.xlu0 %285, %v244
    %v287 = vpop.permute.xlu0 %286
    %290 = vset.pattern.permute.xlu0 0
    %291 = vperm.xlu0 %290, %v245
    %v292 = vpop.permute.xlu0 %291
    %295 = vset.pattern.permute.xlu0 0
    %296 = vperm.xlu0 %295, %v246
    %v297 = vpop.permute.xlu0 %296
    %300 = vset.pattern.permute.xlu0 0
    %301 = vperm.xlu0 %300, %v247
    %v302 = vpop.permute.xlu0 %301
    %305 = vset.pattern.permute.xlu0 0
    %306 = vperm.xlu0 %305, %v248
    %v307 = vpop.permute.xlu0 %306
    %310 = vset.pattern.permute.xlu0 0
    %311 = vperm.xlu0 %310, %v249
    %v312 = vpop.permute.xlu0 %311
    %315 = vset.pattern.permute.xlu0 0
    %316 = vperm.xlu0 %315, %v250
    %v317 = vpop.permute.xlu0 %316
    %320 = vset.pattern.permute.xlu0 0
    %321 = vperm.xlu0 %320, %v251
    %v322 = vpop.permute.xlu0 %321
    %325 = vset.pattern.permute.xlu0 0
    %326 = vperm.xlu0 %325, %v252
    %v327 = vpop.permute.xlu0 %326
    %330 = vset.pattern.permute.xlu0 0
    %331 = vperm.xlu0 %330, %v253
    %v332 = vpop.permute.xlu0 %331
    %v334 = vadd.f32 %v222, %v257
    %v335 = vadd.f32 %v223, %v262
    %v336 = vadd.f32 %v224, %v267
    %v337 = vadd.f32 %v225, %v272
    %v338 = vadd.f32 %v226, %v277
    %v339 = vadd.f32 %v227, %v282
    %v340 = vadd.f32 %v228, %v287
    %v341 = vadd.f32 %v229, %v292
    %v342 = vadd.f32 %v230, %v297
    %v343 = vadd.f32 %v231, %v302
    %v344 = vadd.f32 %v232, %v307
    %v345 = vadd.f32 %v233, %v312
    %v346 = vadd.f32 %v234, %v317
    %v347 = vadd.f32 %v235, %v322
    %v348 = vadd.f32 %v236, %v327
    %v349 = vadd.f32 %v237, %v332
    %v350 = vmul.f32 %v334, 0.5
    %v351 = vmul.f32 %v335, 0.5
    %v352 = vmul.f32 %v336, 0.5
    %v353 = vmul.f32 %v337, 0.5
    %v354 = vmul.f32 %v338, 0.5
    %v355 = vmul.f32 %v339, 0.5
    %v356 = vmul.f32 %v340, 0.5
    %v357 = vmul.f32 %v341, 0.5
    %v358 = vmul.f32 %v342, 0.5
    %v359 = vmul.f32 %v343, 0.5
    %v360 = vmul.f32 %v344, 0.5
    %v361 = vmul.f32 %v345, 0.5
    %v362 = vmul.f32 %v346, 0.5
    %v363 = vmul.f32 %v347, 0.5
    %v364 = vmul.f32 %v348, 0.5
    %v365 = vmul.f32 %v349, 0.5
    %v366 = vtanh.pop %v350
    %v367 = vtanh.pop %v351
    %v368 = vtanh.pop %v352
    %v369 = vtanh.pop %v353
    %v370 = vtanh.pop %v354
    %v371 = vtanh.pop %v355
    %v372 = vtanh.pop %v356
    %v373 = vtanh.pop %v357
    %v374 = vtanh.pop %v358
    %v375 = vtanh.pop %v359
    %v376 = vtanh.pop %v360
    %v377 = vtanh.pop %v361
    %v378 = vtanh.pop %v362
    %v379 = vtanh.pop %v363
    %v380 = vtanh.pop %v364
    %v381 = vtanh.pop %v365
    %v382 = vadd.f32 %v366, 1.0
    %v383 = vadd.f32 %v367, 1.0
    %v384 = vadd.f32 %v368, 1.0
    %v385 = vadd.f32 %v369, 1.0
    %v386 = vadd.f32 %v370, 1.0
    %v387 = vadd.f32 %v371, 1.0
    %v388 = vadd.f32 %v372, 1.0
    %v389 = vadd.f32 %v373, 1.0
    %v390 = vadd.f32 %v374, 1.0
    %v391 = vadd.f32 %v375, 1.0
    %v392 = vadd.f32 %v376, 1.0
    %v393 = vadd.f32 %v377, 1.0
    %v394 = vadd.f32 %v378, 1.0
    %v395 = vadd.f32 %v379, 1.0
    %v396 = vadd.f32 %v380, 1.0
    %v397 = vadd.f32 %v381, 1.0
    %v398 = vmul.f32 %v382, 0.5
    %v399 = vmul.f32 %v383, 0.5
    %v400 = vmul.f32 %v384, 0.5
    %v401 = vmul.f32 %v385, 0.5
    %v402 = vmul.f32 %v386, 0.5
    %v403 = vmul.f32 %v387, 0.5
    %v404 = vmul.f32 %v388, 0.5
    %v405 = vmul.f32 %v389, 0.5
    %v406 = vmul.f32 %v390, 0.5
    %v407 = vmul.f32 %v391, 0.5
    %v408 = vmul.f32 %v392, 0.5
    %v409 = vmul.f32 %v393, 0.5
    %v410 = vmul.f32 %v394, 0.5
    %v411 = vmul.f32 %v395, 0.5
    %v412 = vmul.f32 %v396, 0.5
    %v413 = vmul.f32 %v397, 0.5
    %v414 = vld [vmem:[%s3] sm:$0xff]
    %v415 = vld [vmem:[%s3 + $0x8] sm:$0xff]
    %v416 = vld [vmem:[%s3 + $0x10] sm:$0xff]
    %v417 = vld [vmem:[%s3 + $0x18] sm:$0xff]
    %v418 = vld [vmem:[%s3 + $0x20] sm:$0xff]
    %v419 = vld [vmem:[%s3 + $0x28] sm:$0xff]
    %v420 = vld [vmem:[%s3 + $0x30] sm:$0xff]
    %v421 = vld [vmem:[%s3 + $0x38] sm:$0xff]
    %v422 = vpack.c.bf16 %v415, %v414
    %v423 = vpack.c.bf16 %v417, %v416
    %v424 = vpack.c.bf16 %v419, %v418
    %v425 = vpack.c.bf16 %v421, %v420
    %v426 = vpack.c.bf16 %v399, %v398
    %v427 = vpack.c.bf16 %v401, %v400
    %v428 = vpack.c.bf16 %v403, %v402
    %v429 = vpack.c.bf16 %v405, %v404
    %v430 = vpack.c.bf16 %v407, %v406
    %v431 = vpack.c.bf16 %v409, %v408
    %v432 = vpack.c.bf16 %v411, %v410
    %v433 = vpack.c.bf16 %v413, %v412
    %v434 = vld [vmem:[%s4] sm:$0xff]
    %v435 = vld [vmem:[%s4 + $0x8] sm:$0xff]
    %v436 = vld [vmem:[%s4 + $0x10] sm:$0xff]
    %v437 = vld [vmem:[%s4 + $0x18] sm:$0xff]
    %v438 = vld [vmem:[%s4 + $0x20] sm:$0xff]
    %v439 = vld [vmem:[%s4 + $0x28] sm:$0xff]
    %v440 = vld [vmem:[%s4 + $0x30] sm:$0xff]
    %v441 = vld [vmem:[%s4 + $0x38] sm:$0xff]
    %443 = vset.pattern.permute.xlu0 0
    %444 = vperm.xlu0 %443, %v434
    %v445 = vpop.permute.xlu0 %444
    %448 = vset.pattern.permute.xlu0 0
    %449 = vperm.xlu0 %448, %v435
    %v450 = vpop.permute.xlu0 %449
    %453 = vset.pattern.permute.xlu0 0
    %454 = vperm.xlu0 %453, %v436
    %v455 = vpop.permute.xlu0 %454
    %458 = vset.pattern.permute.xlu0 0
    %459 = vperm.xlu0 %458, %v437
    %v460 = vpop.permute.xlu0 %459
    %463 = vset.pattern.permute.xlu0 0
    %464 = vperm.xlu0 %463, %v438
    %v465 = vpop.permute.xlu0 %464
    %468 = vset.pattern.permute.xlu0 0
    %469 = vperm.xlu0 %468, %v439
    %v470 = vpop.permute.xlu0 %469
    %473 = vset.pattern.permute.xlu0 0
    %474 = vperm.xlu0 %473, %v440
    %v475 = vpop.permute.xlu0 %474
    %478 = vset.pattern.permute.xlu0 0
    %479 = vperm.xlu0 %478, %v441
    %v480 = vpop.permute.xlu0 %479
    %482 = vmatpush.bf16.msra.mxu0 %v433
    %483 = vmatpush.bf16.msra.mxu0 %v432
    %484 = vmatpush.bf16.msra.mxu0 %v431
    %485 = vmatpush.bf16.msra.mxu0 %v430
    %486 = vmatpush.bf16.msra.mxu0 %v429
    %487 = vmatpush.bf16.msra.mxu0 %v428
    %488 = vmatpush.bf16.msra.mxu0 %v427
    %489 = vmatpush.bf16.msra.mxu0 %v426
    %490 = vmatmul.bf16.gmra.mxu0 %v422
    %v491 = vpop.f32.mrf.mxu0
    %v492 = vadd.f32 %v445, %v491
    %v493 = vpop.f32.mrf.mxu0
    %v494 = vadd.f32 %v450, %v493
    %495 = vmatmul.bf16.gmra.mxu0 %v423
    %v496 = vpop.f32.mrf.mxu0
    %v497 = vadd.f32 %v455, %v496
    %v498 = vpop.f32.mrf.mxu0
    %v499 = vadd.f32 %v460, %v498
    %500 = vmatmul.bf16.gmra.mxu0 %v424
    %v501 = vpop.f32.mrf.mxu0
    %v502 = vadd.f32 %v465, %v501
    %v503 = vpop.f32.mrf.mxu0
    %v504 = vadd.f32 %v470, %v503
    %505 = vmatmul.bf16.gmra.mxu0 %v425
    %v506 = vpop.f32.mrf.mxu0
    %v507 = vadd.f32 %v475, %v506
    %v508 = vpop.f32.mrf.mxu0
    %v509 = vadd.f32 %v480, %v508
    %510 = vdwg.mxu0
    %v511 = vmul.f32 %v492, 0.5
    %v512 = vmul.f32 %v494, 0.5
    %v513 = vmul.f32 %v497, 0.5
    %v514 = vmul.f32 %v499, 0.5
    %v515 = vmul.f32 %v502, 0.5
    %v516 = vmul.f32 %v504, 0.5
    %v517 = vmul.f32 %v507, 0.5
    %v518 = vmul.f32 %v509, 0.5
    %v519 = vtanh.pop %v511
    %v520 = vtanh.pop %v512
    %v521 = vtanh.pop %v513
    %v522 = vtanh.pop %v514
    %v523 = vtanh.pop %v515
    %v524 = vtanh.pop %v516
    %v525 = vtanh.pop %v517
    %v526 = vtanh.pop %v518
    %v527 = vadd.f32 %v519, 1.0
    %v528 = vadd.f32 %v520, 1.0
    %v529 = vadd.f32 %v521, 1.0
    %v530 = vadd.f32 %v522, 1.0
    %v531 = vadd.f32 %v523, 1.0
    %v532 = vadd.f32 %v524, 1.0
    %v533 = vadd.f32 %v525, 1.0
    %v534 = vadd.f32 %v526, 1.0
    %v535 = vmul.f32 %v527, 0.5
    %v536 = vmul.f32 %v528, 0.5
    %v537 = vmul.f32 %v529, 0.5
    %v538 = vmul.f32 %v530, 0.5
    %v539 = vmul.f32 %v531, 0.5
    %v540 = vmul.f32 %v532, 0.5
    %v541 = vmul.f32 %v533, 0.5
    %v542 = vmul.f32 %v534, 0.5
    %v543 = vld [vmem:[%s5] sm:$0xf]
    %v544 = vld [vmem:[%s6] sm:$0xf]
    %546 = vset.pattern.permute.xlu0 0
    %547 = vperm.xlu0 %546, %v544
    %v548 = vpop.permute.xlu0 %547
    %vm550 = vcmask 523264
    %v552 = vsel %vm550, %v543, 0
    %554 = vmatpush.msra.mxu0 0.0
    %555 = vmatpush.msra.mxu0 0.0
    %556 = vmatpush.msra.mxu0 0.0
    %557 = vmatpush.msra.mxu0 0.0
    %558 = vmatpush.msra.mxu0 0.0
    %559 = vmatpush.msra.mxu0 0.0
    %560 = vmatpush.msra.mxu0 0.0
    %561 = vmatpush.msra.mxu0 0.0
    %562 = vmatpush.msra.mxu0 %v542
    %563 = vmatpush.msra.mxu0 %v541
    %564 = vmatpush.msra.mxu0 %v540
    %565 = vmatpush.msra.mxu0 %v539
    %566 = vmatpush.msra.mxu0 %v538
    %567 = vmatpush.msra.mxu0 %v537
    %568 = vmatpush.msra.mxu0 %v536
    %569 = vmatpush.msra.mxu0 %v535
    %570 = vmatmul.f32.gmra.mxu0 %v552
    %v571 = vpop.f32.mrf.mxu0
    %v572 = vadd.f32 %v548, %v571
    %573 = vdwg.mxu0
    %vm574 = vcmask 60416
    %v575 = vsel %vm574, %v572, -inf
    %v576 = vrot.slane %v575, 4
    %v577 = vmax.f32 %v575, %v576
    %v578 = vrot.slane %v577, 2
    %v579 = vmax.f32 %v577, %v578
    %v580 = vrot.slane %v579, 1
    %v581 = vmax.f32 %v579, %v580
    %v582 = vsub.f32 %v572, %v581
    %v583 = vmul.f32 %v582, 1.442695
    %v584 = vpow.pop %v583
    %v585 = vsel %vm574, %v584, 0.0
    %v586 = vrot.slane %v585, 4
    %v587 = vadd.f32 %v585, %v586
    %v588 = vrot.slane %v587, 2
    %v589 = vadd.f32 %v587, %v588
    %v590 = vrot.slane %v589, 1
    %v591 = vadd.f32 %v589, %v590
    %v592 = vrcp.pop %v591
    %v593 = vmul.f32 %v591, %v592
    %v594 = vsub.f32 1.0, %v593
    %v595 = vmul.f32 %v592, %v594
    %v596 = vadd.f32 %v592, %v595
    %vm597 = vweird.f32 %v591
    %vm598 = vweird.f32 %v592
    %vm599 = vmor %vm597, %vm598
    %v600 = vsel %vm599, %v592, %v596
    %v601 = vand.u32 2147483647, %v591
    %vm602 = vcmp.eq.f32.partialorder %v601, 8.507059e+37
    %v603 = vand.u32 %v591, 2147483648
    %v604 = vor.u32 1.1754944e-38, %v603
    %v605 = vsel %vm602, %v604, %v600
    %v606 = vmul.f32 1.0, %v605
    %v607 = vmul.f32 %v584, %v606
    %608 = vst.msk [vmem:[#allocation2] sm:$0xf] %vm574, %v607
    // Predicated region
    $region30: #{tpu_custom_call.1} parent=1 // pred_check
      _
    $region31: #{tpu_custom_call.1} parent=1 // pred_check_branch
      %610 = sbr.rel (0) target = $region33
    $region32: #{tpu_custom_call.1} parent=1 // pred_region
      %612 = vsyncadd [#allocation3], 0
      %s614 = sshll.u32 [#allocation2], 4
      %s615 = int_to_ptr.vmem [resolvable:$true] %s614
      %s616 = sshll.u32 %s7, 4
      %s617 = int_to_ptr.hbm [resolvable:$true] %s616
      %619 = dma.vmem_to_hbm [thread:$0]  %s615, 64, %s617, [#allocation3]
    $region33: #{tpu_custom_call.1} parent=1 // pred_fallthru
      _
    // Predicated region
    $region34: #{tpu_custom_call.1} parent=1 // pred_check
      _
    $region35: #{tpu_custom_call.1} parent=1 // pred_check_branch
      %621 = sbr.rel (0) target = $region37
    $region36: #{tpu_custom_call.1} parent=1 // pred_region
      %623 = dma.done [#allocation3], 64
    $region37: #{tpu_custom_call.1} parent=1 // pred_fallthru
      _
    %624 = vsyncpa [#allocation3], 1

</llo_original>
